<compile_context>
chip_gen: v5e
topology: v5e:2x2
jax: 0.10.0
libtpu: 0.0.40
codegen_flags: <defaults>
</compile_context>

<pallas_src>
import jax
import jax.numpy as jnp
from jax.experimental import pallas as pl
from jax.experimental.pallas import tpu as pltpu

_LANES = 128      # lane width
_TM_MAX = 2048    # max sublane rows per block -> 2048*128*4B = 1 MiB per input


def _round_up(x: int, m: int) -> int:
    return ((x + m - 1) // m) * m


def _zero_one_kernel(pred_ref, tgt_ref, out_ref, acc_ref):
    # pred_ref / tgt_ref: (TM, 128) tiles of class indices (native dtype).
    # out_ref: (1, 1) f32 partial mismatch count for this parallel part.
    # acc_ref: (1, 1) f32 running accumulator (persists across the grid).
    step = pl.program_id(1)

    @pl.when(step == 0)
    def _():
        acc_ref[...] = jnp.zeros_like(acc_ref)

    # One VPU compare + one reduction per tile; per-tile f32 sum is exact.
    mismatch = (pred_ref[...] != tgt_ref[...]).astype(jnp.float32)
    acc_ref[...] += jnp.sum(mismatch, keepdims=True)

    @pl.when(step == pl.num_programs(1) - 1)
    def _():
        out_ref[...] = acc_ref[...]


def zero_one_loss(predictions: jax.Array, targets: jax.Array) -> jax.Array:
    """Pallas equivalent of ZeroOneLoss.forward.

    Args:
      predictions: integer array of predicted class indices (shape [batch]).
      targets:     integer array of ground-truth class indices (same shape).
    Returns:
      Scalar float32 zero-one loss (mean mismatch rate).
    """
    assert predictions.shape == targets.shape, \
        "Shape mismatch between predictions and targets"

    # Compare in the narrowest common native dtype; only promote if they differ.
    if predictions.dtype != targets.dtype:
        common = jnp.promote_types(predictions.dtype, targets.dtype)
        predictions = predictions.astype(common)
        targets = targets.astype(common)

    pred_flat = predictions.reshape(-1)
    tgt_flat = targets.reshape(-1)
    n = pred_flat.shape[0]
    itemsize = jnp.dtype(pred_flat.dtype).itemsize

    # ---- choose a dense (rows_padded, 128) layout and tiling ----
    rows = pl.cdiv(n, _LANES)
    rows8 = _round_up(rows, 8)                 # sublane multiple
    tm = min(_TM_MAX, rows8)                   # block rows (multiple of 8)
    num_tiles = pl.cdiv(rows8, tm)
    num_parts = 2 if num_tiles >= 2 else 1     # megacore parallel partial sums
    steps = pl.cdiv(num_tiles, num_parts)
    rows_padded = num_parts * steps * tm
    total_padded = rows_padded * _LANES

    # Pad both arrays with identical values (0) -> padding adds zero mismatches.
    pad = total_padded - n
    pred2d = jnp.pad(pred_flat, (0, pad)).reshape(rows_padded, _LANES)
    tgt2d = jnp.pad(tgt_flat, (0, pad)).reshape(rows_padded, _LANES)

    def in_map(p, i):
        return (p * steps + i, 0)

    partials = pl.pallas_call(
        _zero_one_kernel,
        out_shape=jax.ShapeDtypeStruct((num_parts, 1), jnp.float32),
        grid=(num_parts, steps),
        in_specs=[
            pl.BlockSpec((tm, _LANES), in_map),
            pl.BlockSpec((tm, _LANES), in_map),
        ],
        out_specs=pl.BlockSpec((1, 1), lambda p, i: (p, 0)),
        scratch_shapes=[pltpu.VMEM((1, 1), jnp.float32)],
        compiler_params=pltpu.CompilerParams(
            dimension_semantics=("parallel", "arbitrary"),
        ),
        cost_estimate=pl.CostEstimate(
            flops=2 * total_padded,
            transcendentals=0,
            bytes_accessed=2 * total_padded * itemsize + 4 * num_parts,
        ),
    )(pred2d, tgt2d)

    # Final scalar combine + single 1/n scale (divisor is the ORIGINAL n).
    return (jnp.sum(partials) * jnp.float32(1.0 / n)).astype(jnp.float32)


if __name__ == "__main__":
    key = jax.random.PRNGKey(0)
    kp, kt = jax.random.split(key)
    batch = 8
    num_classes = 4
    predictions = jax.random.randint(kp, (batch,), 0, num_classes, dtype=jnp.int32)
    targets = jax.random.randint(kt, (batch,), 0, num_classes, dtype=jnp.int32)

    loss = zero_one_loss(predictions, targets)
    jax.block_until_ready(loss)

    # Reference check in plain JAX.
    ref = jnp.mean((predictions != targets).astype(jnp.float32))
    assert jnp.allclose(loss, ref), (loss, ref)

    # Larger sanity check exercising the tiled/multi-part path.
    kp2, kt2 = jax.random.split(jax.random.PRNGKey(1))
    big = 600_000
    p_big = jax.random.randint(kp2, (big,), 0, 10, dtype=jnp.int32)
    t_big = jax.random.randint(kt2, (big,), 0, 10, dtype=jnp.int32)
    loss_big = zero_one_loss(p_big, t_big)
    jax.block_until_ready(loss_big)
    ref_big = jnp.mean((p_big != t_big).astype(jnp.float32))
    assert jnp.allclose(loss_big, ref_big, rtol=1e-6, atol=1e-7), (loss_big, ref_big)

    print("KERNEL_OK")
</pallas_src>

<mosaic_0001>
module attributes {stable_mosaic.version = 11 : i64} {
  func.func @_zero_one_kernel(%arg0: i32, %arg1: i32, %arg2: memref<8x128xi32, #tpu.memory_space<vmem>>, %arg3: memref<8x128xi32, #tpu.memory_space<vmem>>, %arg4: memref<1x1xf32, #tpu.memory_space<vmem>>, %arg5: memref<1x1xf32, #tpu.memory_space<vmem>>) attributes {dimension_semantics = [#tpu.dimension_semantics<parallel>, #tpu.dimension_semantics<arbitrary>], iteration_bounds = array<i64: 1, 1>, scalar_prefetch = 0 : i64, scratch_operands = 1 : i64, tpu.core_type = #tpu.core_type<tc>, window_params = [{transform_indices = @transform_0, window_bounds = array<i64: 8, 128>}, {transform_indices = @transform_1, window_bounds = array<i64: 8, 128>}, {transform_indices = @transform_2, window_bounds = array<i64: 1, 1>}]} {
    %c0_i32 = arith.constant 0 : i32
    %0 = arith.cmpi eq, %arg1, %c0_i32 : i32
    %1 = arith.extui %0 : i1 to i32
    %c0_i32_0 = arith.constant 0 : i32
    %2 = arith.cmpi ne, %1, %c0_i32_0 : i32
    scf.if %2 {
      %cst_10 = arith.constant 0.000000e+00 : f32
      %19 = vector.broadcast %cst_10 : f32 to vector<1x1xf32>
      %c0_11 = arith.constant 0 : index
      %c0_12 = arith.constant 0 : index
      %20 = vector.load %arg5[%c0_11, %c0_12] : memref<1x1xf32, #tpu.memory_space<vmem>>, vector<1x1xf32>
      tpu.vector_store %arg5[%c0_11, %c0_12], %19 {strides = array<i32>} : memref<1x1xf32, #tpu.memory_space<vmem>>, vector<1x1xf32>,
    } else {
    }
    %c0 = arith.constant 0 : index
    %c0_1 = arith.constant 0 : index
    %3 = vector.load %arg2[%c0, %c0_1] : memref<8x128xi32, #tpu.memory_space<vmem>>, vector<8x128xi32>
    %c0_2 = arith.constant 0 : index
    %c0_3 = arith.constant 0 : index
    %4 = vector.load %arg3[%c0_2, %c0_3] : memref<8x128xi32, #tpu.memory_space<vmem>>, vector<8x128xi32>
    %5 = arith.cmpi ne, %3, %4 : vector<8x128xi32>
    %6 = arith.extui %5 : vector<8x128xi1> to vector<8x128xi32>
    %7 = arith.sitofp %6 : vector<8x128xi32> to vector<8x128xf32>
    %c0_4 = arith.constant 0 : index
    %c0_5 = arith.constant 0 : index
    %8 = vector.load %arg5[%c0_4, %c0_5] : memref<1x1xf32, #tpu.memory_space<vmem>>, vector<1x1xf32>
    %9 = vector.shape_cast %7 : vector<8x128xf32> to vector<1x8x128xf32>
    %cst = arith.constant dense<0.000000e+00> : vector<1xf32>
    %10 = vector.multi_reduction <add>, %9, %cst [1, 2] : vector<1x8x128xf32> to vector<1xf32>
    %11 = vector.shape_cast %10 : vector<1xf32> to vector<1x1x1xf32>
    %12 = vector.extract %11[0, 0, 0] : f32 from vector<1x1x1xf32>
    %13 = vector.broadcast %12 : f32 to vector<1x1xf32>
    %14 = arith.addf %8, %13 : vector<1x1xf32>
    %c0_6 = arith.constant 0 : index
    %c0_7 = arith.constant 0 : index
    %15 = vector.load %arg5[%c0_6, %c0_7] : memref<1x1xf32, #tpu.memory_space<vmem>>, vector<1x1xf32>
    tpu.vector_store %arg5[%c0_6, %c0_7], %14 {strides = array<i32>} : memref<1x1xf32, #tpu.memory_space<vmem>>, vector<1x1xf32>,
    %c0_i32_8 = arith.constant 0 : i32
    %16 = arith.cmpi eq, %arg1, %c0_i32_8 : i32
    %17 = arith.extui %16 : i1 to i32
    %c0_i32_9 = arith.constant 0 : i32
    %18 = arith.cmpi ne, %17, %c0_i32_9 : i32
    scf.if %18 {
      %c0_10 = arith.constant 0 : index
      %c0_11 = arith.constant 0 : index
      %19 = vector.load %arg5[%c0_10, %c0_11] : memref<1x1xf32, #tpu.memory_space<vmem>>, vector<1x1xf32>
      %c0_12 = arith.constant 0 : index
      %c0_13 = arith.constant 0 : index
      %20 = vector.load %arg4[%c0_12, %c0_13] : memref<1x1xf32, #tpu.memory_space<vmem>>, vector<1x1xf32>
      tpu.vector_store %arg4[%c0_12, %c0_13], %19 {strides = array<i32>} : memref<1x1xf32, #tpu.memory_space<vmem>>, vector<1x1xf32>,
    } else {
    }
    return
  }
  func.func @transform_0(%arg0: i32, %arg1: i32) -> (i32, i32) {
    %c1_i32 = arith.constant 1 : i32
    %0 = arith.muli %arg0, %c1_i32 : i32
    %1 = arith.addi %0, %arg1 : i32
    %c0_i32 = arith.constant 0 : i32
    %c0_i32_0 = arith.constant 0 : i32
    return %1, %c0_i32 : i32, i32
  }
  func.func @transform_1(%arg0: i32, %arg1: i32) -> (i32, i32) {
    %c1_i32 = arith.constant 1 : i32
    %0 = arith.muli %arg0, %c1_i32 : i32
    %1 = arith.addi %0, %arg1 : i32
    %c0_i32 = arith.constant 0 : i32
    %c0_i32_0 = arith.constant 0 : i32
    return %1, %c0_i32 : i32, i32
  }
  func.func @transform_2(%arg0: i32, %arg1: i32) -> (i32, i32) {
    %c0_i32 = arith.constant 0 : i32
    %c0_i32_0 = arith.constant 0 : i32
    return %arg0, %c0_i32 : i32, i32
  }
}

</mosaic_0001>

<llo_original>
// kernel: tpu_custom_call.1
$region0: #{tpu_custom_call.1}
  #allocation0 [shape = 'u32[]', space=smem, size = 0x4, offset = 0x4, fixed_abs, tag = 'smem constant byte address 0x4 - core index']
  #allocation1 [shape = 'u32[72,128]{1,0:T(1,128)}', space=vmem, size = 0x9000, scoped, tag = 'internal scratch']
  #allocation2 [shape = 'f32[1,1]{1,0:T(1,128)}', space=vmem, size = 0x200, scoped, tag = 'scratch operand']
  %s0 = inlined_call_operand.hbm [shape: s32[8,128], index: 0, kind: input, shape index: {}]
  %s1 = inlined_call_operand.hbm [shape: s32[8,128], index: 1, kind: input, shape index: {}]
  %s2 = inlined_call_operand.hbm [shape: f32[1,1], index: 2, kind: output, shape index: {}]
  %s3 = sld [smem:[#allocation0]]
  $region34: #{tpu_custom_call.1} parent=0
    _
  %s5 = ssub.s32 1, %s3
  %s6 = scalar_select 0, %s5, %s3
  $region1: #{tpu_custom_call.1} parent=0
    #allocation3 [shape = 'u8[4096]{0}', space=vmem, size = 0x1000, scoped, tag = 'input window, operand 0, single buffered']
    #allocation4 [shape = 's32[1]{0}', space=sflag, size = 0x4, scoped, tag = 'scoped memory for tpu_custom_call.1']
    #allocation5 [shape = 's32[1]{0}', space=sflag, size = 0x4, scoped, tag = 'scoped memory for tpu_custom_call.1']
    #allocation6 [shape = 'u8[4096]{0}', space=vmem, size = 0x1000, scoped, tag = 'input window, operand 1, single buffered']
    #allocation7 [shape = 's32[1]{0}', space=sflag, size = 0x4, scoped, tag = 'scoped memory for tpu_custom_call.1']
    #allocation8 [shape = 'u8[512]{0}', space=vmem, size = 0x400, scoped, tag = 'output window, operand 0, single buffered']
    %7 = vsyncpa [#allocation4], 0
    %8 = vsyncpa [#allocation7], 0
    %9 = vsyncpa [#allocation5], 0
    // Predicated region
    $region2: #{tpu_custom_call.1} parent=1 // pred_check
      _
    $region3: #{tpu_custom_call.1} parent=1 // pred_check_branch
      %11 = sbr.rel (0) target = $region5
    $region4: #{tpu_custom_call.1} parent=1 // pred_region
      %s12 = sadd.s32 0, 0
      %14 = vsyncadd [#allocation4], 0
      %s15 = smul.addr %s12, 8
      %s16 = scalar_lea.hbm %s0, %s15
      %s18 = sshll.u32 %s16, 4
      %s19 = int_to_ptr.hbm [resolvable:$true] %s18
      %s20 = sshll.u32 [#allocation3], 4
      %s21 = int_to_ptr.vmem [resolvable:$true] %s20
      %23 = dma.hbm_to_vmem [thread:$0]  %s19, 128, %s21, [#allocation4]
    $region5: #{tpu_custom_call.1} parent=1 // pred_fallthru
      _
    // Predicated region
    $region6: #{tpu_custom_call.1} parent=1 // pred_check
      _
    $region7: #{tpu_custom_call.1} parent=1 // pred_check_branch
      %25 = sbr.rel (0) target = $region9
    $region8: #{tpu_custom_call.1} parent=1 // pred_region
      %s26 = sadd.s32 0, 0
      %28 = vsyncadd [#allocation7], 0
      %s29 = smul.addr %s26, 8
      %s30 = scalar_lea.hbm %s1, %s29
      %s32 = sshll.u32 %s30, 4
      %s33 = int_to_ptr.hbm [resolvable:$true] %s32
      %s34 = sshll.u32 [#allocation6], 4
      %s35 = int_to_ptr.vmem [resolvable:$true] %s34
      %37 = dma.hbm_to_vmem [thread:$0]  %s33, 128, %s35, [#allocation7]
    $region9: #{tpu_custom_call.1} parent=1 // pred_fallthru
      _
    // Predicated region
    $region10: #{tpu_custom_call.1} parent=1 // pred_check
      _
    $region11: #{tpu_custom_call.1} parent=1 // pred_check_branch
      %39 = sbr.rel (0) target = $region13
    $region12: #{tpu_custom_call.1} parent=1 // pred_region
      %41 = dma.done [#allocation4], 128
    $region13: #{tpu_custom_call.1} parent=1 // pred_fallthru
      _
    // Predicated region
    $region14: #{tpu_custom_call.1} parent=1 // pred_check
      _
    $region15: #{tpu_custom_call.1} parent=1 // pred_check_branch
      %43 = sbr.rel (0) target = $region17
    $region16: #{tpu_custom_call.1} parent=1 // pred_region
      %45 = dma.done [#allocation7], 128
    $region17: #{tpu_custom_call.1} parent=1 // pred_fallthru
      _
    %s46 = sadd.s32 0, 0
    %s47 = sadd.s32 0, 0
    %p48 = scmp.eq.s32.totalorder 0, 0
    // Predicated region
    $region18: #{tpu_custom_call.1} parent=1 // pred_check
      %p49 = pneg %p48
    $region19: #{tpu_custom_call.1} parent=1 // pred_check_branch
      %51 = sbr.rel (%p49) target = $region21
    $region20: #{tpu_custom_call.1} parent=1 // pred_region
      %vm52 = vcmask 0
      %53 = vst.msk [vmem:[#allocation2] sm:$0x1] %vm52, 0.0
    $region21: #{tpu_custom_call.1} parent=1 // pred_fallthru
      _
    %v54 = vld [vmem:[#allocation3] sm:$0xff]
    %v55 = vld [vmem:[#allocation6] sm:$0xff]
    %vm56 = vcmp.ne.s32.totalorder %v54, %v55
    %v57 = vsel %vm56, 1, 0
    %v58 = vcvt.s32.f32 %v57
    %v59 = vld [vmem:[#allocation2] sm:$0x1]
    %60 = vadd.xlane.f32.xlu0 %v58
    %v61 = vpop.xlane.xlu0 %60
    %v62 = vrot.slane %v61, 4
    %v63 = vadd.f32 %v61, %v62
    %v64 = vrot.slane %v63, 2
    %v65 = vadd.f32 %v63, %v64
    %v66 = vrot.slane %v65, 1
    %v67 = vadd.f32 %v65, %v66
    %s68 = vtos %v67
    %v69 = vstv %s68
    %v70 = vadd.f32 %v59, %v69
    %vm71 = vcmask 0
    %72 = vst.msk [vmem:[#allocation2] sm:$0x1] %vm71, %v70
    // Predicated region
    $region22: #{tpu_custom_call.1} parent=1 // pred_check
      %p73 = pneg %p48
    $region23: #{tpu_custom_call.1} parent=1 // pred_check_branch
      %75 = sbr.rel (%p73) target = $region25
    $region24: #{tpu_custom_call.1} parent=1 // pred_region
      %v76 = vld [vmem:[#allocation2] sm:$0x1]
      %77 = vst.msk [vmem:[#allocation8] sm:$0x1] %vm71, %v76
    $region25: #{tpu_custom_call.1} parent=1 // pred_fallthru
      _
    // Predicated region
    $region26: #{tpu_custom_call.1} parent=1 // pred_check
      _
    $region27: #{tpu_custom_call.1} parent=1 // pred_check_branch
      %79 = sbr.rel (0) target = $region29
    $region28: #{tpu_custom_call.1} parent=1 // pred_region
      %81 = vsyncadd [#allocation5], 0
      %s83 = sshll.u32 [#allocation8], 4
      %s84 = int_to_ptr.vmem [resolvable:$true] %s83
      %s85 = sshll.u32 %s2, 4
      %s86 = int_to_ptr.hbm [resolvable:$true] %s85
      %88 = dma.vmem_to_hbm [thread:$0]  %s84, 16, %s86, [#allocation5]
    $region29: #{tpu_custom_call.1} parent=1 // pred_fallthru
      _
    // Predicated region
    $region30: #{tpu_custom_call.1} parent=1 // pred_check
      _
    $region31: #{tpu_custom_call.1} parent=1 // pred_check_branch
      %90 = sbr.rel (0) target = $region33
    $region32: #{tpu_custom_call.1} parent=1 // pred_region
      %92 = dma.done [#allocation5], 16
    $region33: #{tpu_custom_call.1} parent=1 // pred_fallthru
      _
    %93 = vsyncpa [#allocation4], 1
    %94 = vsyncpa [#allocation7], 1
    %95 = vsyncpa [#allocation5], 1

</llo_original>
